<compile_context>
chip_gen: v6e
topology: v6e:2x2x1
jax: 0.10.0
libtpu: 0.0.40
codegen_flags: <defaults>
</compile_context>

<pallas_src>
import functools

import jax
import jax.numpy as jnp
from jax.experimental import pallas as pl
from jax.experimental.pallas import tpu as pltpu

_TN_CAP = 2048  # max pixels per grid step (lane tile), multiple of 128


def _make_kernel(C, HW, TN, tiles_per_split):
    """Builds the per-tile kernel (all shape params are static Python ints)."""
    needs_mask = (HW % TN) != 0

    def kernel(logits_ref, labels_ref, stats_ref, ce_ref):
        # logits_ref: (C, TN) input dtype   labels_ref: (1, TN) i32
        # stats_ref : (3, C, TN) f32 accumulator [tp, sum_p, sum_y]
        # ce_ref    : (1, TN) f32 accumulator of per-pixel CE
        @pl.when(jnp.logical_and(pl.program_id(1) == 0, pl.program_id(2) == 0))
        def _init():
            stats_ref[...] = jnp.zeros_like(stats_ref)
            ce_ref[...] = jnp.zeros_like(ce_ref)

        x = logits_ref[...].astype(jnp.float32)            # (C, TN)
        lab = labels_ref[...]                              # (1, TN)

        cls = jax.lax.broadcasted_iota(jnp.int32, (C, TN), 0)
        y_bool = cls == lab                                # one-hot target

        if needs_mask:
            # trailing partial tile: mask pixels past HW
            tile = pl.program_id(0) * tiles_per_split + pl.program_id(2)
            lane = jax.lax.broadcasted_iota(jnp.int32, (1, TN), 1)
            valid = (tile * TN + lane) < HW                # (1, TN)
            valid_f = valid.astype(jnp.float32)
            x = jnp.where(valid, x, 0.0)
            y_bool = jnp.logical_and(y_bool, valid)

        y = y_bool.astype(jnp.float32)

        # softmax over the class (sublane) axis
        m = jnp.max(x, axis=0, keepdims=True)              # (1, TN)
        e = jnp.exp(x - m)
        s = jnp.sum(e, axis=0, keepdims=True)              # (1, TN)
        p = e / s                                          # (C, TN)
        if needs_mask:
            p = p * valid_f

        # Tversky partials (per class, per lane; lane reduction in wrapper)
        stats_ref[0, :, :] += p * y                        # TP
        stats_ref[1, :, :] += p                            # sum of softmax prob
        stats_ref[2, :, :] += y                            # label counts

        # cross entropy: -log softmax[target] = log(s) + m - x[target]
        x_t = jnp.sum(x * y, axis=0, keepdims=True)        # (1, TN)
        ce = jnp.log(s) + m - x_t
        if needs_mask:
            ce = ce * valid_f
        ce_ref[...] += ce

    return kernel


@functools.partial(jax.jit, static_argnames=(
    "alpha", "beta", "smooth", "do_bg", "weight_ce", "weight_tversky"))
def tversky_and_ce_loss(net_output, target, *, alpha=0.3, beta=0.7,
                        smooth=1e-5, do_bg=False, weight_ce=1.0,
                        weight_tversky=1.0):
    """net_output: (B, C, H, W) float logits; target: (B, 1, H, W) int labels."""
    B, C, H, W = net_output.shape
    HW = H * W

    # Free reshapes (no transpose, no padding copy): NCHW -> (B, C, HW).
    logits = net_output.reshape(B, C, HW)        # dtype passed through (bf16 ok)
    labels = target.reshape(B, 1, HW).astype(jnp.int32)

    # Lane tile: big (amortize per-step overhead), multiple of 128.
    TN = min(_TN_CAP, ((HW + 127) // 128) * 128)
    n_tiles = pl.cdiv(HW, TN)
    # 2-way pixel split on a leading "parallel" axis (uses both v7x TCs).
    nsplit = 2 if (n_tiles % 2 == 0 and n_tiles >= 2) else 1
    tiles_per_split = n_tiles // nsplit

    kernel = _make_kernel(C, HW, TN, tiles_per_split)

    cost = pl.CostEstimate(
        flops=int(10 * C * B * HW),
        transcendentals=int((C + 1) * B * HW),
        bytes_accessed=int(B * HW * (C * net_output.dtype.itemsize + 4)),
    )

    stats, ce_part = pl.pallas_call(
        kernel,
        out_shape=(
            jax.ShapeDtypeStruct((nsplit, 3, C, TN), jnp.float32),
            jax.ShapeDtypeStruct((nsplit, 1, TN), jnp.float32),
        ),
        grid_spec=pl.GridSpec(
            grid=(nsplit, B, tiles_per_split),
            in_specs=[
                pl.BlockSpec((None, C, TN),
                             lambda s, b, i: (b, 0, s * tiles_per_split + i)),
                pl.BlockSpec((None, 1, TN),
                             lambda s, b, i: (b, 0, s * tiles_per_split + i)),
            ],
            out_specs=(
                pl.BlockSpec((None, 3, C, TN), lambda s, b, i: (s, 0, 0, 0)),
                pl.BlockSpec((None, 1, TN), lambda s, b, i: (s, 0, 0)),
            ),
        ),
        compiler_params=pltpu.CompilerParams(
            dimension_semantics=("parallel", "arbitrary", "arbitrary")),
        cost_estimate=cost,
    )(logits, labels)

    # Final (tiny) reductions + Tversky / CE formulas in plain JAX.
    tp = jnp.sum(stats[:, 0, :, :], axis=(0, 2))           # (C,)
    psum = jnp.sum(stats[:, 1, :, :], axis=(0, 2))          # (C,)
    ysum = jnp.sum(stats[:, 2, :, :], axis=(0, 2))          # (C,)
    fp = psum - tp
    fn = ysum - tp
    if not do_bg:
        tp, fp, fn = tp[1:], fp[1:], fn[1:]
    tversky = (tp + smooth) / jnp.clip(tp + alpha * fp + beta * fn + smooth,
                                       1e-8)
    tversky_loss = -jnp.mean(tversky)                       # batch_dice=True
    ce_loss = jnp.sum(ce_part) / (B * HW)                   # mean reduction
    return weight_ce * ce_loss + weight_tversky * tversky_loss


def _ref_loss(net_output, target, *, alpha=0.3, beta=0.7, smooth=1e-5,
              do_bg=False, weight_ce=1.0, weight_tversky=1.0):
    """Pure-JAX reference replicating the PyTorch module's forward."""
    B, C, H, W = net_output.shape
    x = net_output.astype(jnp.float32)
    p = jax.nn.softmax(x, axis=1)
    lab = target[:, 0].astype(jnp.int32)                   # (B, H, W)
    y = jax.nn.one_hot(lab, C, axis=1, dtype=jnp.float32)
    axes = (0, 2, 3)                                        # batch_dice=True
    tp = jnp.sum(p * y, axes)
    fp = jnp.sum(p * (1.0 - y), axes)
    fn = jnp.sum((1.0 - p) * y, axes)
    if not do_bg:
        tp, fp, fn = tp[1:], fp[1:], fn[1:]
    tversky = (tp + smooth) / jnp.clip(tp + alpha * fp + beta * fn + smooth,
                                       1e-8)
    tversky_loss = -jnp.mean(tversky)
    logp = jax.nn.log_softmax(x, axis=1)
    ce_loss = -jnp.mean(jnp.sum(logp * y, axis=1))
    return weight_ce * ce_loss + weight_tversky * tversky_loss


if __name__ == "__main__":
    key = jax.random.PRNGKey(0)
    B, C, H, W = 2, 4, 16, 16
    k1, k2 = jax.random.split(key)
    net_output = jax.random.normal(k1, (B, C, H, W), dtype=jnp.float32)
    target = jax.random.randint(k2, (B, 1, H, W), 0, C, dtype=jnp.int32)

    loss = tversky_and_ce_loss(net_output, target)
    loss = jax.block_until_ready(loss)

    ref = _ref_loss(net_output, target)
    assert jnp.allclose(loss, ref, atol=1e-5, rtol=1e-5), (float(loss),
                                                           float(ref))
    print("KERNEL_OK")
</pallas_src>

<mosaic_0001>
module attributes {stable_mosaic.version = 11 : i64} {
  func.func @kernel(%arg0: i32, %arg1: i32, %arg2: i32, %arg3: memref<1x4x256xf32, #tpu.memory_space<vmem>>, %arg4: memref<1x1x256xi32, #tpu.memory_space<vmem>>, %arg5: memref<1x3x4x256xf32, #tpu.memory_space<vmem>>, %arg6: memref<1x1x256xf32, #tpu.memory_space<vmem>>) attributes {dimension_semantics = [#tpu.dimension_semantics<parallel>, #tpu.dimension_semantics<arbitrary>, #tpu.dimension_semantics<arbitrary>], iteration_bounds = array<i64: 1, 2, 1>, scalar_prefetch = 0 : i64, scratch_operands = 0 : i64, tpu.core_type = #tpu.core_type<tc>, window_params = [{transform_indices = @transform_0, window_bounds = array<i64: 1, 4, 256>}, {transform_indices = @transform_1, window_bounds = array<i64: 1, 1, 256>}, {transform_indices = @transform_2, window_bounds = array<i64: 1, 3, 4, 256>}, {transform_indices = @transform_3, window_bounds = array<i64: 1, 1, 256>}]} {
    %c0_i32 = arith.constant 0 : i32
    %0 = arith.cmpi eq, %arg1, %c0_i32 : i32
    %c0_i32_0 = arith.constant 0 : i32
    %1 = arith.cmpi eq, %arg2, %c0_i32_0 : i32
    %2 = arith.andi %0, %1 : i1
    %3 = arith.extui %2 : i1 to i32
    %c0_i32_1 = arith.constant 0 : i32
    %4 = arith.cmpi ne, %3, %c0_i32_1 : i32
    scf.if %4 {
      %cst_37 = arith.constant 0.000000e+00 : f32
      %54 = vector.broadcast %cst_37 : f32 to vector<3x4x256xf32>
      %c0_38 = arith.constant 0 : index
      %c0_39 = arith.constant 0 : index
      %c0_40 = arith.constant 0 : index
      %c0_41 = arith.constant 0 : index
      %55 = vector.load %arg5[%c0_38, %c0_39, %c0_40, %c0_41] : memref<1x3x4x256xf32, #tpu.memory_space<vmem>>, vector<1x3x4x256xf32>
      %56 = vector.shape_cast %55 : vector<1x3x4x256xf32> to vector<3x4x256xf32>
      %57 = vector.shape_cast %54 : vector<3x4x256xf32> to vector<1x3x4x256xf32>
      tpu.vector_store %arg5[%c0_38, %c0_39, %c0_40, %c0_41], %57 {strides = array<i32>} : memref<1x3x4x256xf32, #tpu.memory_space<vmem>>, vector<1x3x4x256xf32>,
      %cst_42 = arith.constant 0.000000e+00 : f32
      %58 = vector.broadcast %cst_42 : f32 to vector<1x256xf32>
      %c0_43 = arith.constant 0 : index
      %c0_44 = arith.constant 0 : index
      %c0_45 = arith.constant 0 : index
      %59 = vector.load %arg6[%c0_43, %c0_44, %c0_45] : memref<1x1x256xf32, #tpu.memory_space<vmem>>, vector<1x1x256xf32>
      %60 = vector.shape_cast %59 : vector<1x1x256xf32> to vector<1x256xf32>
      %61 = vector.shape_cast %58 : vector<1x256xf32> to vector<1x1x256xf32>
      tpu.vector_store %arg6[%c0_43, %c0_44, %c0_45], %61 {strides = array<i32>} : memref<1x1x256xf32, #tpu.memory_space<vmem>>, vector<1x1x256xf32>,
    } else {
    }
    %c0 = arith.constant 0 : index
    %c0_2 = arith.constant 0 : index
    %c0_3 = arith.constant 0 : index
    %5 = vector.load %arg3[%c0, %c0_2, %c0_3] : memref<1x4x256xf32, #tpu.memory_space<vmem>>, vector<1x4x256xf32>
    %6 = vector.shape_cast %5 : vector<1x4x256xf32> to vector<4x256xf32>
    %c0_4 = arith.constant 0 : index
    %c0_5 = arith.constant 0 : index
    %c0_6 = arith.constant 0 : index
    %7 = vector.load %arg4[%c0_4, %c0_5, %c0_6] : memref<1x1x256xi32, #tpu.memory_space<vmem>>, vector<1x1x256xi32>
    %8 = vector.shape_cast %7 : vector<1x1x256xi32> to vector<1x256xi32>
    %9 = tpu.iota {dimensions = array<i32: 0>} : vector<4x256xi32>
    %10 = vector.broadcast %8 : vector<1x256xi32> to vector<4x256xi32>
    %11 = arith.cmpi eq, %9, %10 : vector<4x256xi32>
    %12 = arith.extui %11 : vector<4x256xi1> to vector<4x256xi32>
    %13 = arith.sitofp %12 : vector<4x256xi32> to vector<4x256xf32>
    %cst = arith.constant dense<0xFF800000> : vector<256xf32>
    %14 = vector.multi_reduction <maximumf>, %6, %cst [0] : vector<4x256xf32> to vector<256xf32>
    %15 = vector.shape_cast %14 : vector<256xf32> to vector<1x256xf32>
    %16 = vector.broadcast %15 : vector<1x256xf32> to vector<4x256xf32>
    %17 = arith.subf %6, %16 : vector<4x256xf32>
    %18 = math.exp %17 : vector<4x256xf32>
    %cst_7 = arith.constant dense<0.000000e+00> : vector<256xf32>
    %19 = vector.multi_reduction <add>, %18, %cst_7 [0] : vector<4x256xf32> to vector<256xf32>
    %20 = vector.shape_cast %19 : vector<256xf32> to vector<1x256xf32>
    %21 = vector.broadcast %20 : vector<1x256xf32> to vector<4x256xf32>
    %22 = arith.divf %18, %21 : vector<4x256xf32>
    %c0_8 = arith.constant 0 : index
    %c0_9 = arith.constant 0 : index
    %c0_10 = arith.constant 0 : index
    %c0_11 = arith.constant 0 : index
    %23 = vector.load %arg5[%c0_8, %c0_9, %c0_10, %c0_11] : memref<1x3x4x256xf32, #tpu.memory_space<vmem>>, vector<1x1x4x256xf32>
    %24 = vector.shape_cast %23 : vector<1x1x4x256xf32> to vector<4x256xf32>
    %25 = arith.mulf %22, %13 : vector<4x256xf32>
    %26 = arith.addf %24, %25 : vector<4x256xf32>
    %c0_12 = arith.constant 0 : index
    %c0_13 = arith.constant 0 : index
    %c0_14 = arith.constant 0 : index
    %c0_15 = arith.constant 0 : index
    %27 = vector.load %arg5[%c0_12, %c0_13, %c0_14, %c0_15] : memref<1x3x4x256xf32, #tpu.memory_space<vmem>>, vector<1x1x4x256xf32>
    %28 = vector.shape_cast %27 : vector<1x1x4x256xf32> to vector<4x256xf32>
    %29 = vector.shape_cast %26 : vector<4x256xf32> to vector<1x1x4x256xf32>
    tpu.vector_store %arg5[%c0_12, %c0_13, %c0_14, %c0_15], %29 {strides = array<i32>} : memref<1x3x4x256xf32, #tpu.memory_space<vmem>>, vector<1x1x4x256xf32>,
    %c0_16 = arith.constant 0 : index
    %c1 = arith.constant 1 : index
    %c0_17 = arith.constant 0 : index
    %c0_18 = arith.constant 0 : index
    %30 = vector.load %arg5[%c0_16, %c1, %c0_17, %c0_18] : memref<1x3x4x256xf32, #tpu.memory_space<vmem>>, vector<1x1x4x256xf32>
    %31 = vector.shape_cast %30 : vector<1x1x4x256xf32> to vector<4x256xf32>
    %32 = arith.addf %31, %22 : vector<4x256xf32>
    %c0_19 = arith.constant 0 : index
    %c1_20 = arith.constant 1 : index
    %c0_21 = arith.constant 0 : index
    %c0_22 = arith.constant 0 : index
    %33 = vector.load %arg5[%c0_19, %c1_20, %c0_21, %c0_22] : memref<1x3x4x256xf32, #tpu.memory_space<vmem>>, vector<1x1x4x256xf32>
    %34 = vector.shape_cast %33 : vector<1x1x4x256xf32> to vector<4x256xf32>
    %35 = vector.shape_cast %32 : vector<4x256xf32> to vector<1x1x4x256xf32>
    tpu.vector_store %arg5[%c0_19, %c1_20, %c0_21, %c0_22], %35 {strides = array<i32>} : memref<1x3x4x256xf32, #tpu.memory_space<vmem>>, vector<1x1x4x256xf32>,
    %c0_23 = arith.constant 0 : index
    %c2 = arith.constant 2 : index
    %c0_24 = arith.constant 0 : index
    %c0_25 = arith.constant 0 : index
    %36 = vector.load %arg5[%c0_23, %c2, %c0_24, %c0_25] : memref<1x3x4x256xf32, #tpu.memory_space<vmem>>, vector<1x1x4x256xf32>
    %37 = vector.shape_cast %36 : vector<1x1x4x256xf32> to vector<4x256xf32>
    %38 = arith.addf %37, %13 : vector<4x256xf32>
    %c0_26 = arith.constant 0 : index
    %c2_27 = arith.constant 2 : index
    %c0_28 = arith.constant 0 : index
    %c0_29 = arith.constant 0 : index
    %39 = vector.load %arg5[%c0_26, %c2_27, %c0_28, %c0_29] : memref<1x3x4x256xf32, #tpu.memory_space<vmem>>, vector<1x1x4x256xf32>
    %40 = vector.shape_cast %39 : vector<1x1x4x256xf32> to vector<4x256xf32>
    %41 = vector.shape_cast %38 : vector<4x256xf32> to vector<1x1x4x256xf32>
    tpu.vector_store %arg5[%c0_26, %c2_27, %c0_28, %c0_29], %41 {strides = array<i32>} : memref<1x3x4x256xf32, #tpu.memory_space<vmem>>, vector<1x1x4x256xf32>,
    %42 = arith.mulf %6, %13 : vector<4x256xf32>
    %cst_30 = arith.constant dense<0.000000e+00> : vector<256xf32>
    %43 = vector.multi_reduction <add>, %42, %cst_30 [0] : vector<4x256xf32> to vector<256xf32>
    %44 = vector.shape_cast %43 : vector<256xf32> to vector<1x256xf32>
    %45 = math.log %20 : vector<1x256xf32>
    %46 = arith.addf %45, %15 : vector<1x256xf32>
    %47 = arith.subf %46, %44 : vector<1x256xf32>
    %c0_31 = arith.constant 0 : index
    %c0_32 = arith.constant 0 : index
    %c0_33 = arith.constant 0 : index
    %48 = vector.load %arg6[%c0_31, %c0_32, %c0_33] : memref<1x1x256xf32, #tpu.memory_space<vmem>>, vector<1x1x256xf32>
    %49 = vector.shape_cast %48 : vector<1x1x256xf32> to vector<1x256xf32>
    %50 = arith.addf %49, %47 : vector<1x256xf32>
    %c0_34 = arith.constant 0 : index
    %c0_35 = arith.constant 0 : index
    %c0_36 = arith.constant 0 : index
    %51 = vector.load %arg6[%c0_34, %c0_35, %c0_36] : memref<1x1x256xf32, #tpu.memory_space<vmem>>, vector<1x1x256xf32>
    %52 = vector.shape_cast %51 : vector<1x1x256xf32> to vector<1x256xf32>
    %53 = vector.shape_cast %50 : vector<1x256xf32> to vector<1x1x256xf32>
    tpu.vector_store %arg6[%c0_34, %c0_35, %c0_36], %53 {strides = array<i32>} : memref<1x1x256xf32, #tpu.memory_space<vmem>>, vector<1x1x256xf32>,
    return
  }
  func.func @transform_0(%arg0: i32, %arg1: i32, %arg2: i32) -> (i32, i32, i32) {
    %c1_i32 = arith.constant 1 : i32
    %0 = arith.muli %arg0, %c1_i32 : i32
    %1 = arith.addi %0, %arg2 : i32
    %c0_i32 = arith.constant 0 : i32
    %c0_i32_0 = arith.constant 0 : i32
    return %arg1, %c0_i32, %1 : i32, i32, i32
  }
  func.func @transform_1(%arg0: i32, %arg1: i32, %arg2: i32) -> (i32, i32, i32) {
    %c1_i32 = arith.constant 1 : i32
    %0 = arith.muli %arg0, %c1_i32 : i32
    %1 = arith.addi %0, %arg2 : i32
    %c0_i32 = arith.constant 0 : i32
    %c0_i32_0 = arith.constant 0 : i32
    return %arg1, %c0_i32, %1 : i32, i32, i32
  }
  func.func @transform_2(%arg0: i32, %arg1: i32, %arg2: i32) -> (i32, i32, i32, i32) {
    %c0_i32 = arith.constant 0 : i32
    %c0_i32_0 = arith.constant 0 : i32
    %c0_i32_1 = arith.constant 0 : i32
    %c0_i32_2 = arith.constant 0 : i32
    return %arg0, %c0_i32, %c0_i32_0, %c0_i32_1 : i32, i32, i32, i32
  }
  func.func @transform_3(%arg0: i32, %arg1: i32, %arg2: i32) -> (i32, i32, i32) {
    %c0_i32 = arith.constant 0 : i32
    %c0_i32_0 = arith.constant 0 : i32
    %c0_i32_1 = arith.constant 0 : i32
    return %arg0, %c0_i32, %c0_i32_0 : i32, i32, i32
  }
}

</mosaic_0001>

<llo_original>
// kernel: tversky_and_ce_loss.1
$region0: #{tversky_and_ce_loss.1}
  #allocation0 [shape = 'u32[]', space=smem, size = 0x4, offset = 0x4, fixed_abs, tag = 'smem constant byte address 0x4 - core index']
  #allocation1 [shape = 'u32[144,128]{1,0:T(1,128)}', space=vmem, size = 0x12000, scoped, tag = 'internal scratch']
  %s0 = inlined_call_operand.vmem [shape: f32[2,4,256], index: 0, kind: input, shape index: {}]
  %s1 = inlined_call_operand.vmem [shape: s32[2,1,256], index: 1, kind: input, shape index: {}]
  %s2 = inlined_call_operand.vmem [shape: f32[1,3,4,256], index: 2, kind: output, shape index: {0}]
  %s3 = inlined_call_operand.vmem [shape: f32[1,1,256], index: 3, kind: output, shape index: {1}]
  %4 = xla_tuple %s2, %s3
  %s5 = sld [smem:[#allocation0]]
  $region53: #{tversky_and_ce_loss.1} parent=0
    _
  %s7 = ssub.s32 1, %s5
  %s8 = scalar_select 0, %s7, %s5
  loop: start=0, step=1, limit=4
  $region2: #{tversky_and_ce_loss.1} parent=0 // loop_pre_header
    _
  $region3: #{tversky_and_ce_loss.1} parent=0 // loop_header
    %s10 = sphi 0, %s14
    %p11 = scmp.ge.s32.totalorder %s10, 4
    %s17 = sphi 0, %s36
    %s18 = sphi 0, %s32
    %s19 = sphi 0, %s28
    %s20 = sphi 0, %s17
    %s21 = sphi 0, %s18
    %s22 = sphi 0, %s19
    %s23 = sphi 0, %s20
    %s24 = sphi 0, %s21
    %s25 = sphi 0, %s22
    %s43 = sphi 0, %s45
    %s46 = sphi 0, %s43
    %s47 = sphi 0, %s46
    %s63 = sphi 0, %s47
    %s73 = sphi 0, %s75
    %s76 = sphi 0, %s73
    %s77 = sphi 0, %s76
    %s93 = sphi 0, %s77
    %s99 = sphi 0, %s101
    %s102 = sphi 0, %s99
    %s103 = sphi 0, %s102
    %s119 = sphi 0, %s103
    %s125 = sphi 0, %s127
    %s128 = sphi 0, %s125
    %s129 = sphi 0, %s128
    %s145 = sphi 0, %s129
  $region4: #{tversky_and_ce_loss.1} parent=0 // loop_header_branch
    %13 = sbr.rel (%p11) target = $region8
  $region5: #{tversky_and_ce_loss.1} parent=0 // loop_body
    %s15 = ssub.s32 %s10, 1
    %s16 = ssub.s32 %s10, 2
    %s26 = sadd.s32 1, %s19
    %p27 = scmp.ge.s32.totalorder %s26, 1
    %s28 = scalar_select %p27, 0, %s26
    %s29 = sadd.s32 1, %s18
    %s30 = scalar_select %p27, %s29, %s18
    %p31 = scmp.ge.s32.totalorder %s30, 2
    %s32 = scalar_select %p31, 0, %s30
    %s33 = sadd.s32 1, %s17
    %s34 = scalar_select %p31, %s33, %s17
    %p35 = scmp.ge.s32.totalorder %s34, 1
    %s36 = scalar_select %p35, 0, %s34
    %s37 = sadd.s32 %s17, %s19
    %s38 = sadd.s32 %s36, %s28
    %s39 = ssub.s32 %s18, %s32
    %s40 = ssub.s32 %s37, %s38
    %s41 = sor.u32 %s39, %s40
    %p42 = scmp.eq.s32.totalorder %s41, 0
    %s44 = sadd.s32 %s43, 1
    %s45 = scalar_select %p42, %s43, %s44
    %p48 = pneg %p42
    %p49 = scmp.eq.s32.totalorder %s10, 1
    %p50 = por %p48, %p49
    %p51 = scmp.ne.s32.totalorder %s43, %s46
    %p52 = scmp.eq.s32.totalorder %s10, 0
    %p53 = por %p51, %p52
    %p54 = scmp.ne.s32.totalorder %s43, %s46
    %p55 = scmp.eq.s32.totalorder %s15, 1
    %p56 = por %p54, %p55
    %p57 = scmp.ne.s32.totalorder %s46, %s47
    %p58 = scmp.eq.s32.totalorder %s15, 0
    %p59 = por %p57, %p58
    %p60 = scmp.ne.s32.totalorder %s46, %s47
    %p61 = scmp.eq.s32.totalorder %s16, 1
    %p62 = por %p60, %p61
    %p64 = scmp.ne.s32.totalorder %s47, %s63
    %p65 = scmp.eq.s32.totalorder %s16, 0
    %p66 = por %p64, %p65
    %s67 = sadd.s32 %s17, %s19
    %s68 = sadd.s32 %s36, %s28
    %s69 = ssub.s32 %s18, %s32
    %s70 = ssub.s32 %s67, %s68
    %s71 = sor.u32 %s69, %s70
    %p72 = scmp.eq.s32.totalorder %s71, 0
    %s74 = sadd.s32 %s73, 1
    %s75 = scalar_select %p72, %s73, %s74
    %p78 = pneg %p72
    %p79 = scmp.eq.s32.totalorder %s10, 1
    %p80 = por %p78, %p79
    %p81 = scmp.ne.s32.totalorder %s73, %s76
    %p82 = scmp.eq.s32.totalorder %s10, 0
    %p83 = por %p81, %p82
    %p84 = scmp.ne.s32.totalorder %s73, %s76
    %p85 = scmp.eq.s32.totalorder %s15, 1
    %p86 = por %p84, %p85
    %p87 = scmp.ne.s32.totalorder %s76, %s77
    %p88 = scmp.eq.s32.totalorder %s15, 0
    %p89 = por %p87, %p88
    %p90 = scmp.ne.s32.totalorder %s76, %s77
    %p91 = scmp.eq.s32.totalorder %s16, 1
    %p92 = por %p90, %p91
    %p94 = scmp.ne.s32.totalorder %s77, %s93
    %p95 = scmp.eq.s32.totalorder %s16, 0
    %p96 = por %p94, %p95
    %s97 = ssub.s32 %s17, %s36
    %p98 = scmp.eq.s32.totalorder %s97, 0
    %s100 = sadd.s32 %s99, 1
    %s101 = scalar_select %p98, %s99, %s100
    %p104 = pneg %p98
    %p105 = scmp.eq.s32.totalorder %s10, 1
    %p106 = por %p104, %p105
    %p107 = scmp.ne.s32.totalorder %s99, %s102
    %p108 = scmp.eq.s32.totalorder %s10, 0
    %p109 = por %p107, %p108
    %p110 = scmp.ne.s32.totalorder %s99, %s102
    %p111 = scmp.eq.s32.totalorder %s15, 1
    %p112 = por %p110, %p111
    %p113 = scmp.ne.s32.totalorder %s102, %s103
    %p114 = scmp.eq.s32.totalorder %s15, 0
    %p115 = por %p113, %p114
    %p116 = scmp.ne.s32.totalorder %s102, %s103
    %p117 = scmp.eq.s32.totalorder %s16, 1
    %p118 = por %p116, %p117
    %p120 = scmp.ne.s32.totalorder %s103, %s119
    %p121 = scmp.eq.s32.totalorder %s16, 0
    %p122 = por %p120, %p121
    %s123 = ssub.s32 %s17, %s36
    %p124 = scmp.eq.s32.totalorder %s123, 0
    %s126 = sadd.s32 %s125, 1
    %s127 = scalar_select %p124, %s125, %s126
    %p130 = pneg %p124
    %p131 = scmp.eq.s32.totalorder %s10, 1
    %p132 = por %p130, %p131
    %p133 = scmp.ne.s32.totalorder %s125, %s128
    %p134 = scmp.eq.s32.totalorder %s10, 0
    %p135 = por %p133, %p134
    %p136 = scmp.ne.s32.totalorder %s125, %s128
    %p137 = scmp.eq.s32.totalorder %s15, 1
    %p138 = por %p136, %p137
    %p139 = scmp.ne.s32.totalorder %s128, %s129
    %p140 = scmp.eq.s32.totalorder %s15, 0
    %p141 = por %p139, %p140
    %p142 = scmp.ne.s32.totalorder %s128, %s129
    %p143 = scmp.eq.s32.totalorder %s16, 1
    %p144 = por %p142, %p143
    %p146 = scmp.ne.s32.totalorder %s129, %s145
    %p147 = scmp.eq.s32.totalorder %s16, 0
    %p148 = por %p146, %p147
    %p149 = scmp.le.s32.totalorder 1, %s10
    %p150 = scmp.lt.s32.totalorder %s10, 3
    %p151 = pnand %p149, %p150
    %p152 = pneg %p151
    // Predicated region
    $region9: #{tversky_and_ce_loss.1} parent=5 // pred_check
      _
    $region10: #{tversky_and_ce_loss.1} parent=5 // pred_check_branch
      %154 = sbr.rel (%p151) target = $region12
    $region11: #{tversky_and_ce_loss.1} parent=5 // pred_region
      %s155 = ssub.s32 %s10, 1
    $region12: #{tversky_and_ce_loss.1} parent=5 // pred_fallthru
      _
    %p156 = scmp.lt.s32.totalorder %s10, 2
    // Predicated region
    $region13: #{tversky_and_ce_loss.1} parent=5 // pred_check
      %p157 = pneg %p156
    $region14: #{tversky_and_ce_loss.1} parent=5 // pred_check_branch
      %159 = sbr.rel (%p157) target = $region16
    $region15: #{tversky_and_ce_loss.1} parent=5 // pred_region
      // Predicated region
      $region17: #{tversky_and_ce_loss.1} parent=15 // pred_check
        %p160 = pneg %p53
      $region18: #{tversky_and_ce_loss.1} parent=15 // pred_check_branch
        %162 = sbr.rel (%p160) target = $region20
      $region19: #{tversky_and_ce_loss.1} parent=15 // pred_region
        %s163 = sadd.s32 %s17, %s19
        %s164 = smul.u32 2, %s163
        %p165 = scmp.lt.s32.totalorder %s18, 1
        %s166 = scalar_select %p165, %s18, 1
        %p167 = scmp.lt.s32.totalorder %s164, 1
        %s168 = scalar_select %p167, %s164, 1
        %s169 = smul.addr %s166, 2
        %s170 = sadd.s32 %s168, %s169
        %s171 = smul.addr %s170, 4
        %s172 = scalar_lea.vmem %s0, %s171
        %s173 = sadd.s32 %s17, %s19
        %s174 = smul.u32 2, %s173
      $region20: #{tversky_and_ce_loss.1} parent=15 // pred_fallthru
        _
      // Predicated region
      $region21: #{tversky_and_ce_loss.1} parent=15 // pred_check
        %p175 = pneg %p83
      $region22: #{tversky_and_ce_loss.1} parent=15 // pred_check_branch
        %177 = sbr.rel (%p175) target = $region24
      $region23: #{tversky_and_ce_loss.1} parent=15 // pred_region
        %s178 = sadd.s32 %s17, %s19
        %s179 = smul.u32 2, %s178
        %p180 = scmp.lt.s32.totalorder %s18, 1
        %s181 = scalar_select %p180, %s18, 1
        %p182 = scmp.lt.s32.totalorder %s179, 1
        %s183 = scalar_select %p182, %s179, 1
        %s184 = smul.addr %s181, 2
        %s185 = sadd.s32 %s183, %s184
        %s186 = scalar_lea.vmem %s1, %s185
        %s187 = sadd.s32 %s17, %s19
        %s188 = smul.u32 2, %s187
      $region24: #{tversky_and_ce_loss.1} parent=15 // pred_fallthru
        _
    $region16: #{tversky_and_ce_loss.1} parent=5 // pred_fallthru
      _
    %p189 = scmp.le.s32.totalorder 1, %s10
    %p190 = scmp.lt.s32.totalorder %s10, 3
    %p191 = pnand %p189, %p190
    %p192 = pneg %p191
    // Predicated region
    $region25: #{tversky_and_ce_loss.1} parent=5 // pred_check
      _
    $region26: #{tversky_and_ce_loss.1} parent=5 // pred_check_branch
      %194 = sbr.rel (%p191) target = $region28
    $region27: #{tversky_and_ce_loss.1} parent=5 // pred_region
      %s195 = ssub.s32 %s10, 1
      %s196 = sadd.s32 %s20, %s22
      %s197 = smul.u32 2, %s196
      %p198 = scmp.lt.s32.totalorder %s21, 1
      %s199 = scalar_select %p198, %s21, 1
      %p200 = scmp.lt.s32.totalorder %s197, 1
      %s201 = scalar_select %p200, %s197, 1
      %s202 = smul.addr %s199, 2
      %s203 = sadd.s32 %s201, %s202
      %s204 = smul.addr %s203, 4
      %s205 = scalar_lea.vmem %s0, %s204
      %p206 = pneg %p59
      %p207 = pneg %p56
      %s208 = sadd.s32 %s20, %s22
      %s209 = smul.u32 2, %s208
      %p210 = scmp.lt.s32.totalorder %s21, 1
      %s211 = scalar_select %p210, %s21, 1
      %p212 = scmp.lt.s32.totalorder %s209, 1
      %s213 = scalar_select %p212, %s209, 1
      %s214 = smul.addr %s211, 2
      %s215 = sadd.s32 %s213, %s214
      %s216 = scalar_lea.vmem %s1, %s215
      %p217 = pneg %p89
      %p218 = pneg %p86
      %p219 = pneg %p115
      %p220 = pneg %p112
      %p221 = scmp.lt.s32.totalorder %s20, 0
      %s222 = scalar_select %p221, %s20, 0
      %s223 = smul.addr %s222, 6
      %s224 = smul.addr %s223, 4
      %s225 = scalar_lea.vmem %s2, %s224
      %p226 = pneg %p141
      %p227 = pneg %p138
      %p228 = scmp.lt.s32.totalorder %s20, 0
      %s229 = scalar_select %p228, %s20, 0
      %s230 = smul.addr %s229, 2
      %s231 = scalar_lea.vmem %s3, %s230
      %s232 = sadd.s32 %s20, %s22
      %s233 = smul.u32 2, %s232
      %p234 = scmp.lt.s32.totalorder %s21, 1
      %s235 = scalar_select %p234, %s21, 1
      %p236 = scmp.lt.s32.totalorder %s233, 1
      %s237 = scalar_select %p236, %s233, 1
      %s238 = smul.addr %s235, 2
      %s239 = sadd.s32 %s237, %s238
      %s240 = smul.addr %s239, 4
      %s241 = scalar_lea.vmem %s0, %s240
      %s242 = sadd.s32 %s20, %s22
      %s243 = smul.u32 2, %s242
      %s244 = sadd.s32 %s20, %s22
      %s245 = smul.u32 2, %s244
      %p246 = scmp.lt.s32.totalorder %s21, 1
      %s247 = scalar_select %p246, %s21, 1
      %p248 = scmp.lt.s32.totalorder %s245, 1
      %s249 = scalar_select %p248, %s245, 1
      %s250 = smul.addr %s247, 2
      %s251 = sadd.s32 %s249, %s250
      %s252 = scalar_lea.vmem %s1, %s251
      %s253 = sadd.s32 %s20, %s22
      %s254 = smul.u32 2, %s253
      %p255 = scmp.lt.s32.totalorder %s20, 0
      %s256 = scalar_select %p255, %s20, 0
      %s257 = smul.addr %s256, 6
      %s258 = smul.addr %s257, 4
      %s259 = scalar_lea.vmem %s2, %s258
      %p260 = scmp.lt.s32.totalorder %s20, 0
      %s261 = scalar_select %p260, %s20, 0
      %s262 = smul.addr %s261, 2
      %s263 = scalar_lea.vmem %s3, %s262
      %p264 = scmp.eq.s32.totalorder %s21, 0
      %p265 = scmp.eq.s32.totalorder %s22, 0
      %p266 = pnand %p264, %p265
      %p267 = pneg %p266
      // Predicated region
      $region29: #{tversky_and_ce_loss.1} parent=27 // pred_check
        _
      $region30: #{tversky_and_ce_loss.1} parent=27 // pred_check_branch
        %269 = sbr.rel (%p266) target = $region32
      $region31: #{tversky_and_ce_loss.1} parent=27 // pred_region
        %270 = vst [vmem:[%s259] sm:$0xff] 0.0
        %271 = vst [vmem:[%s259 + $0x8] sm:$0xff] 0.0
        %272 = vst [vmem:[%s259 + $0x10] sm:$0xff] 0.0
        %v273 = vlaneseq
        %vm274 = vcmp.ge.s32.totalorder %v273, 0
        %vm275 = vcmp.lt.s32.totalorder %v273, 256
        %vm276 = vmand %vm274, %vm275
        %277 = vst.msk [vmem:[%s263] sm:$0x3] %vm276, 0.0
      $region32: #{tversky_and_ce_loss.1} parent=27 // pred_fallthru
        _
      %v278 = vld [vmem:[%s241] sm:$0xff]
      %v279 = vld [vmem:[%s252] sm:$0x3]
      %v280 = vlaneseq
      %v281 = vshrl.u32 %v280, 7
      %v282 = vlaneseq
      %v283 = vshrl.u32 %v282, 7
      %v284 = vsub.s32 0, %v283
      %v285 = vrot.slane %v279, %v284
      %v286 = vlaneseq
      %v287 = vshrl.u32 %v286, 7
      %v288 = vsub.s32 1, %v287
      %v289 = vrot.slane %v279, %v288
      %vm290 = vcmp.eq.s32.totalorder %v281, %v285
      %vm291 = vcmp.eq.s32.totalorder %v281, %v289
      %v292 = vsel %vm290, 1, 0
      %v293 = vsel %vm291, 1, 0
      %v294 = vcvt.s32.f32 %v292
      %v295 = vcvt.s32.f32 %v293
      %v297 = vcombine.high %v278, %v278
      %vm299 = vcmask 1043456
      %v300 = vsel %vm299, %v278, -inf
      %v301 = vrot.slane %v300, 4
      %v302 = vmax.f32 %v300, %v301
      %v303 = vrot.slane %v302, 2
      %v304 = vmax.f32 %v302, %v303
      %v305 = vrot.slane %v304, 1
      %v306 = vmax.f32 %v304, %v305
      %v307 = vsel %vm299, %v297, -inf
      %v308 = vrot.slane %v307, 4
      %v309 = vmax.f32 %v307, %v308
      %v310 = vrot.slane %v309, 2
      %v311 = vmax.f32 %v309, %v310
      %v312 = vrot.slane %v311, 1
      %v313 = vmax.f32 %v311, %v312
      %v316 = vcombine.low %v306, %v313
      %v318 = vsub.f32 %v278, %v316
      %v319 = vmul.f32 %v318, 1.442695
      %v320 = vpow.pop %v319
      %v322 = vcombine.high %v320, %v320
      %v324 = vsel %vm299, %v320, 0.0
      %v325 = vrot.slane %v324, 4
      %v326 = vadd.f32 %v324, %v325
      %v327 = vrot.slane %v326, 2
      %v328 = vadd.f32 %v326, %v327
      %v329 = vrot.slane %v328, 1
      %v330 = vadd.f32 %v328, %v329
      %v331 = vsel %vm299, %v322, 0.0
      %v332 = vrot.slane %v331, 4
      %v333 = vadd.f32 %v331, %v332
      %v334 = vrot.slane %v333, 2
      %v335 = vadd.f32 %v333, %v334
      %v336 = vrot.slane %v335, 1
      %v337 = vadd.f32 %v335, %v336
      %v340 = vcombine.low %v330, %v337
      %v342 = vrcp.pop %v340
      %v343 = vmul.f32 %v320, %v342
      %v344 = vld [vmem:[%s259] sm:$0xff]
      %v347 = vcombine.low %v294, %v295
      %v349 = vmul.f32 %v343, %v347
      %v350 = vadd.f32 %v344, %v349
      %351 = vst [vmem:[%s259] sm:$0xff] %v350
      %s352 = scalar_lea.vmem %s259, 8
      %v353 = vld [vmem:[%s352] sm:$0xff]
      %v354 = vadd.f32 %v353, %v343
      %355 = vst [vmem:[%s352] sm:$0xff] %v354
      %s356 = scalar_lea.vmem %s259, 16
      %v357 = vld [vmem:[%s356] sm:$0xff]
      %v358 = vadd.f32 %v357, %v347
      %359 = vst [vmem:[%s356] sm:$0xff] %v358
      %v360 = vmul.f32 %v278, %v347
      %v362 = vcombine.high %v360, %v360
      %v364 = vsel %vm299, %v360, 0.0
      %v365 = vrot.slane %v364, 4
      %v366 = vadd.f32 %v364, %v365
      %v367 = vrot.slane %v366, 2
      %v368 = vadd.f32 %v366, %v367
      %v369 = vrot.slane %v368, 1
      %v370 = vadd.f32 %v368, %v369
      %v371 = vsel %vm299, %v362, 0.0
      %v372 = vrot.slane %v371, 4
      %v373 = vadd.f32 %v371, %v372
      %v374 = vrot.slane %v373, 2
      %v375 = vadd.f32 %v373, %v374
      %v376 = vrot.slane %v375, 1
      %v377 = vadd.f32 %v375, %v376
      %v378 = vlog2.pop %v330
      %v379 = vmul.f32 %v378, 0.6931472
      %v380 = vlog2.pop %v337
      %v381 = vmul.f32 %v380, 0.6931472
      %v382 = vadd.f32 %v379, %v306
      %v383 = vadd.f32 %v381, %v313
      %v384 = vsub.f32 %v382, %v370
      %v385 = vsub.f32 %v383, %v377
      %v386 = vld [vmem:[%s263] sm:$0x3]
      %v389 = vcombine.low %v384, %v385
      %v391 = vunpack.c.l.s4 1966171168
      %v392 = vunpack.c.0.s8 %v391
      %v393 = vlaneseq
      %v394 = vshrl.u32 %v393, 7
      %v395 = vsub.s32 %v392, %v394
      %v396 = vrot.slane %v389, %v395
      %v398 = vunpack.c.l.s4 1966171168
      %v399 = vunpack.c.0.s8 %v398
      %v400 = vlaneseq
      %v401 = vshrl.u32 %v400, 7
      %v402 = vsub.s32 %v399, %v401
      %v403 = vrot.slane %v396, %v402
      %v405 = vadd.f32 %v386, %v403
      %v406 = vlaneseq
      %vm407 = vcmp.ge.s32.totalorder %v406, 0
      %vm408 = vcmp.lt.s32.totalorder %v406, 256
      %vm409 = vmand %vm407, %vm408
      %410 = vst.msk [vmem:[%s263] sm:$0x3] %vm409, %v405
      %p411 = scmp.lt.s32.totalorder %s20, 0
      %s412 = scalar_select %p411, %s20, 0
      %s413 = smul.addr %s412, 6
      %s414 = smul.addr %s413, 4
      %s415 = scalar_lea.vmem %s2, %s414
      %p416 = scmp.lt.s32.totalorder %s20, 0
      %s417 = scalar_select %p416, %s20, 0
      %s418 = smul.addr %s417, 2
      %s419 = scalar_lea.vmem %s3, %s418
      // Predicated region
      $region33: #{tversky_and_ce_loss.1} parent=27 // pred_check
        %p420 = pneg %p112
      $region34: #{tversky_and_ce_loss.1} parent=27 // pred_check_branch
        %422 = sbr.rel (%p420) target = $region36
      $region35: #{tversky_and_ce_loss.1} parent=27 // pred_region
        _
      $region36: #{tversky_and_ce_loss.1} parent=27 // pred_fallthru
        _
      // Predicated region
      $region37: #{tversky_and_ce_loss.1} parent=27 // pred_check
        %p423 = pneg %p138
      $region38: #{tversky_and_ce_loss.1} parent=27 // pred_check_branch
        %425 = sbr.rel (%p423) target = $region40
      $region39: #{tversky_and_ce_loss.1} parent=27 // pred_region
        _
      $region40: #{tversky_and_ce_loss.1} parent=27 // pred_fallthru
        _
      // Predicated region
      $region41: #{tversky_and_ce_loss.1} parent=27 // pred_check
        %p426 = pneg %p112
      $region42: #{tversky_and_ce_loss.1} parent=27 // pred_check_branch
        %428 = sbr.rel (%p426) target = $region44
      $region43: #{tversky_and_ce_loss.1} parent=27 // pred_region
        %p429 = scmp.lt.s32.totalorder %s20, 0
        %s430 = scalar_select %p429, %s20, 0
        %s431 = smul.addr %s430, 6
        %s432 = smul.addr %s431, 4
        %s433 = scalar_lea.vmem %s2, %s432
      $region44: #{tversky_and_ce_loss.1} parent=27 // pred_fallthru
        _
      // Predicated region
      $region45: #{tversky_and_ce_loss.1} parent=27 // pred_check
        %p434 = pneg %p138
      $region46: #{tversky_and_ce_loss.1} parent=27 // pred_check_branch
        %436 = sbr.rel (%p434) target = $region48
      $region47: #{tversky_and_ce_loss.1} parent=27 // pred_region
        %p437 = scmp.lt.s32.totalorder %s20, 0
        %s438 = scalar_select %p437, %s20, 0
        %s439 = smul.addr %s438, 2
        %s440 = scalar_lea.vmem %s3, %s439
      $region48: #{tversky_and_ce_loss.1} parent=27 // pred_fallthru
        _
    $region28: #{tversky_and_ce_loss.1} parent=5 // pred_fallthru
      _
    %p441 = scmp.le.s32.totalorder 2, %s10
    // Predicated region
    $region49: #{tversky_and_ce_loss.1} parent=5 // pred_check
      %p442 = pneg %p441
    $region50: #{tversky_and_ce_loss.1} parent=5 // pred_check_branch
      %444 = sbr.rel (%p442) target = $region52
    $region51: #{tversky_and_ce_loss.1} parent=5 // pred_region
      %s445 = ssub.s32 %s10, 2
    $region52: #{tversky_and_ce_loss.1} parent=5 // pred_fallthru
      _
  $region6: #{tversky_and_ce_loss.1} parent=0 // loop_footer
    %s14 = sadd.s32 1, %s10
  $region7: #{tversky_and_ce_loss.1} parent=0 // loop_footer_branch
    %9 = sbr.rel target = $region3
  $region8: #{tversky_and_ce_loss.1} parent=0 // loop_exit
    _

</llo_original>
